<compile_context>
chip_gen: v7x
topology: tpu7x:2x2x1
jax: 0.10.0
libtpu: 0.0.40
codegen_flags: <defaults>
</compile_context>

<pallas_src>
import functools

import jax
import jax.numpy as jnp
from jax.experimental import pallas as pl
from jax.experimental.pallas import tpu as pltpu

GAMMA = 2.0
ALPHA = 0.25          # PyTorch module stores alpha_vec = [1 - alpha, alpha]
LANES = 128
ROW_ALIGN = 64        # tile_rows % 64 == 0: legal sublanes for f32/bf16/int8
MAX_TILE_ROWS = 2048  # (2048,128) f32 tile = 1 MiB; 2 inputs x 2 bufs = 4 MiB
ACC_ROWS = 64         # per-step accumulator: 8 vregs -> independent add chains


def _round_up(x, m):
    return (x + m - 1) // m * m


def _to_f32(v):
    # Narrow integer / bool loads go through i32 before f32 (always lowerable).
    if jnp.issubdtype(v.dtype, jnp.integer) or v.dtype == jnp.bool_:
        v = v.astype(jnp.int32)
    return v.astype(jnp.float32)


def _focal_loss_kernel(x_ref, t_ref, out_ref, acc_ref, *,
                       gamma, alpha, n_valid, tile_rows, acc_rows):
    j = pl.program_id(1)  # reduction (streaming) axis

    @pl.when(j == 0)
    def _():
        acc_ref[...] = jnp.zeros_like(acc_ref)

    x = _to_f32(x_ref[...])
    t = _to_f32(t_ref[...])

    # Numerically stable BCE-with-logits (reduction='none'):
    #   bce = max(x, 0) - x*t + log1p(exp(-|x|))
    e = jnp.exp(-jnp.abs(x))                           # EUP op 1
    bce = jnp.maximum(x, 0.0) - x * t + jnp.log1p(e)   # EUP op 2

    # at = alpha_vec.gather(0, targets) with alpha_vec = [1-a, a]; targets are
    # {0,1} so the gather is plain arithmetic (no int cast / select needed).
    at = t * jnp.float32(alpha) + (1.0 - t) * jnp.float32(1.0 - alpha)

    # pt = exp(-bce) WITHOUT a second exp:
    #   exp(x*t - max(x,0)) is 1 when sign(x) agrees with the target, else e,
    #   hence pt = sel / (1 + e).
    sel = jnp.where(jnp.logical_xor(x >= 0.0, t > 0.5), e, 1.0)
    pt = sel / (1.0 + e)
    q = 1.0 - pt
    if float(gamma) == 2.0:
        mod = q * q                      # avoid exp(g*log(q)) transcendentals
    elif float(gamma) == int(gamma) and gamma >= 0:
        mod = q ** int(gamma)            # integer power -> repeated multiply
    else:
        mod = q ** gamma

    contrib = at * mod * bce

    if n_valid is not None:
        # Zero out the zero-padded tail: a padded (x=0, t=0) element would
        # otherwise contribute ~0.75 * 0.25 * ln(2) to the sum.
        base_row = (pl.program_id(0) * pl.num_programs(1) + j) * tile_rows
        row_ids = jax.lax.broadcasted_iota(jnp.int32, contrib.shape, 0)
        lane_ids = jax.lax.broadcasted_iota(jnp.int32, contrib.shape, 1)
        flat_idx = (base_row + row_ids) * LANES + lane_ids
        contrib = jnp.where(flat_idx < n_valid, contrib, 0.0)

    # Fold (tile_rows,128) -> (acc_rows,128) before the accumulator RMW so the
    # per-step scratch traffic is 32 KiB instead of a full tile.
    partial = contrib[0:acc_rows, :]
    for k in range(1, tile_rows // acc_rows):
        partial = partial + contrib[k * acc_rows:(k + 1) * acc_rows, :]
    acc_ref[...] += partial

    @pl.when(j == pl.num_programs(1) - 1)
    def _():
        # Final per-core fold (acc_rows,128) -> (8,128), lane-dense store.
        acc = acc_ref[...]
        r = acc[0:8, :]
        for k in range(1, acc_rows // 8):
            r = r + acc[k * 8:(k + 1) * 8, :]
        out_ref[0] = r


def focal_loss(inputs: jax.Array, targets: jax.Array,
               gamma: float = GAMMA, alpha: float = ALPHA) -> jax.Array:
    """Pallas TPU focal loss (mean reduction). Any shape; targets in {0,1}."""
    assert inputs.shape == targets.shape
    x = inputs.reshape(-1)
    t = targets.reshape(-1)
    n = x.shape[0]

    rows = pl.cdiv(n, LANES)
    # Shard the stream across 2 TensorCores (v7x megacore) when there is
    # enough work; a size-1 axis is harmless on single-TC v5e/v6e.
    num_par = 2 if rows >= 2 * ROW_ALIGN else 1
    rows_per_core = pl.cdiv(rows, num_par)
    steps = max(1, pl.cdiv(rows_per_core, MAX_TILE_ROWS))
    tile_rows = _round_up(pl.cdiv(rows_per_core, steps), ROW_ALIGN)
    acc_rows = min(ACC_ROWS, tile_rows)
    rows_padded = num_par * steps * tile_rows
    n_padded = rows_padded * LANES

    if n_padded != n:
        # Zero-pad to a whole number of tiles; the kernel masks the tail.
        x = jnp.pad(x, (0, n_padded - n))
        t = jnp.pad(t, (0, n_padded - n))
        n_valid = n
    else:
        n_valid = None

    # Keep native dtypes: casts happen inside the kernel, so bf16 logits and
    # int8 targets stream at their narrow HBM width.
    x2d = x.reshape(rows_padded, LANES)
    t2d = t.reshape(rows_padded, LANES)

    kernel = functools.partial(
        _focal_loss_kernel, gamma=gamma, alpha=alpha, n_valid=n_valid,
        tile_rows=tile_rows, acc_rows=acc_rows)
    in_map = lambda i, j: (i * steps + j, 0)   # core i owns contiguous blocks

    partials = pl.pallas_call(
        kernel,
        out_shape=jax.ShapeDtypeStruct((num_par, 8, LANES), jnp.float32),
        grid_spec=pltpu.PrefetchScalarGridSpec(
            num_scalar_prefetch=0,
            grid=(num_par, steps),
            in_specs=[
                pl.BlockSpec((tile_rows, LANES), in_map),
                pl.BlockSpec((tile_rows, LANES), in_map),
            ],
            out_specs=pl.BlockSpec((1, 8, LANES), lambda i, j: (i, 0, 0)),
            scratch_shapes=[pltpu.VMEM((acc_rows, LANES), jnp.float32)],
        ),
        # Note for v7x: confirm via xprof that the leading "parallel" axis is
        # actually core-split; if not, switch it to pltpu.CORE_PARALLEL.
        compiler_params=pltpu.CompilerParams(
            dimension_semantics=("parallel", "arbitrary"),
            vmem_limit_bytes=32 * 1024 * 1024),
    )(x2d, t2d)

    # Tiny final reduction + mean (over the ORIGINAL n) in plain JAX.
    return jnp.sum(partials) / n


def _focal_loss_ref(inputs, targets, gamma=GAMMA, alpha=ALPHA):
    """Pure-JAX reference mirroring the PyTorch module exactly."""
    x = inputs.astype(jnp.float32).reshape(-1)
    t = targets.astype(jnp.float32).reshape(-1)
    bce = jnp.maximum(x, 0.0) - x * t + jnp.log1p(jnp.exp(-jnp.abs(x)))
    alpha_vec = jnp.array([1.0 - alpha, alpha], dtype=jnp.float32)
    at = alpha_vec[t.astype(jnp.int32)]
    pt = jnp.exp(-bce)
    f_loss = at * (1.0 - pt) ** gamma * bce
    return jnp.mean(f_loss)


if __name__ == "__main__":
    key = jax.random.PRNGKey(0)
    k1, k2, k3, k4 = jax.random.split(key, 4)

    # Case 1: f32 logits / f32 targets, flat [2048] node-level logits.
    n1 = 2048
    x1 = jax.random.normal(k1, (n1,), dtype=jnp.float32) * 2.0
    t1 = jax.random.bernoulli(k2, p=0.3, shape=(n1,)).astype(jnp.float32)
    out1 = jax.block_until_ready(focal_loss(x1, t1))
    ref1 = jax.block_until_ready(_focal_loss_ref(x1, t1))
    assert jnp.allclose(out1, ref1, rtol=5e-5, atol=1e-6), (out1, ref1)

    # Case 2: bf16 logits / int8 targets with an awkward, non-128-aligned
    # shape: exercises flatten + zero-pad + in-kernel masking and the
    # narrow-dtype streaming contract (the recommended caller setup).
    shape2 = (41, 100)  # 4100 elements
    x2 = (jax.random.normal(k3, shape2, dtype=jnp.float32) * 2.0).astype(jnp.bfloat16)
    t2 = jax.random.bernoulli(k4, p=0.3, shape=shape2).astype(jnp.int8)
    out2 = jax.block_until_ready(focal_loss(x2, t2))
    ref2 = jax.block_until_ready(_focal_loss_ref(x2, t2))
    assert jnp.allclose(out2, ref2, rtol=5e-5, atol=1e-6), (out2, ref2)

    print("KERNEL_OK")
</pallas_src>

<mosaic_0001>
module attributes {stable_mosaic.version = 11 : i64} {
  func.func @_focal_loss_kernel(%arg0: i32, %arg1: i32, %arg2: memref<64x128xf32, #tpu.memory_space<vmem>>, %arg3: memref<64x128xf32, #tpu.memory_space<vmem>>, %arg4: memref<1x8x128xf32, #tpu.memory_space<vmem>>, %arg5: memref<64x128xf32, #tpu.memory_space<vmem>>) attributes {dimension_semantics = [#tpu.dimension_semantics<parallel>, #tpu.dimension_semantics<arbitrary>], iteration_bounds = array<i64: 1, 1>, scalar_prefetch = 0 : i64, scratch_operands = 1 : i64, tpu.core_type = #tpu.core_type<tc>, window_params = [{transform_indices = @transform_0, window_bounds = array<i64: 64, 128>}, {transform_indices = @transform_1, window_bounds = array<i64: 64, 128>}, {transform_indices = @transform_2, window_bounds = array<i64: 1, 8, 128>}]} {
    %c0_i32 = arith.constant 0 : i32
    %0 = arith.cmpi eq, %arg1, %c0_i32 : i32
    %1 = arith.extui %0 : i1 to i32
    %c0_i32_0 = arith.constant 0 : i32
    %2 = arith.cmpi ne, %1, %c0_i32_0 : i32
    scf.if %2 {
      %cst_20 = arith.constant 0.000000e+00 : f32
      %57 = vector.broadcast %cst_20 : f32 to vector<64x128xf32>
      %c0_21 = arith.constant 0 : index
      %c0_22 = arith.constant 0 : index
      %58 = vector.load %arg5[%c0_21, %c0_22] : memref<64x128xf32, #tpu.memory_space<vmem>>, vector<64x128xf32>
      tpu.vector_store %arg5[%c0_21, %c0_22], %57 {strides = array<i32>} : memref<64x128xf32, #tpu.memory_space<vmem>>, vector<64x128xf32>,
    } else {
    }
    %c0 = arith.constant 0 : index
    %c0_1 = arith.constant 0 : index
    %3 = vector.load %arg2[%c0, %c0_1] : memref<64x128xf32, #tpu.memory_space<vmem>>, vector<64x128xf32>
    %c0_2 = arith.constant 0 : index
    %c0_3 = arith.constant 0 : index
    %4 = vector.load %arg3[%c0_2, %c0_3] : memref<64x128xf32, #tpu.memory_space<vmem>>, vector<64x128xf32>
    %5 = math.absf %3 : vector<64x128xf32>
    %cst = arith.constant 0.000000e+00 : f32
    %6 = vector.broadcast %cst : f32 to vector<64x128xf32>
    %7 = arith.subf %6, %5 : vector<64x128xf32>
    %8 = math.exp %7 : vector<64x128xf32>
    %cst_4 = arith.constant 0.000000e+00 : f32
    %9 = vector.broadcast %cst_4 : f32 to vector<64x128xf32>
    %10 = arith.maximumf %3, %9 : vector<64x128xf32>
    %11 = arith.mulf %3, %4 : vector<64x128xf32>
    %12 = arith.subf %10, %11 : vector<64x128xf32>
    %13 = math.log1p %8 : vector<64x128xf32>
    %14 = arith.addf %12, %13 : vector<64x128xf32>
    %cst_5 = arith.constant 2.500000e-01 : f32
    %15 = vector.broadcast %cst_5 : f32 to vector<64x128xf32>
    %16 = arith.mulf %4, %15 : vector<64x128xf32>
    %cst_6 = arith.constant 1.000000e+00 : f32
    %17 = vector.broadcast %cst_6 : f32 to vector<64x128xf32>
    %18 = arith.subf %17, %4 : vector<64x128xf32>
    %cst_7 = arith.constant 7.500000e-01 : f32
    %19 = vector.broadcast %cst_7 : f32 to vector<64x128xf32>
    %20 = arith.mulf %18, %19 : vector<64x128xf32>
    %21 = arith.addf %16, %20 : vector<64x128xf32>
    %cst_8 = arith.constant 0.000000e+00 : f32
    %22 = vector.broadcast %cst_8 : f32 to vector<64x128xf32>
    %23 = arith.cmpf oge, %3, %22 : vector<64x128xf32>
    %cst_9 = arith.constant 5.000000e-01 : f32
    %24 = vector.broadcast %cst_9 : f32 to vector<64x128xf32>
    %25 = arith.cmpf ogt, %4, %24 : vector<64x128xf32>
    %26 = arith.xori %23, %25 : vector<64x128xi1>
    %cst_10 = arith.constant 1.000000e+00 : f32
    %27 = vector.broadcast %cst_10 : f32 to vector<64x128xf32>
    %28 = arith.select %26, %8, %27 : vector<64x128xi1>, vector<64x128xf32>
    %cst_11 = arith.constant 1.000000e+00 : f32
    %29 = vector.broadcast %cst_11 : f32 to vector<64x128xf32>
    %30 = arith.addf %29, %8 : vector<64x128xf32>
    %31 = arith.divf %28, %30 : vector<64x128xf32>
    %cst_12 = arith.constant 1.000000e+00 : f32
    %32 = vector.broadcast %cst_12 : f32 to vector<64x128xf32>
    %33 = arith.subf %32, %31 : vector<64x128xf32>
    %34 = arith.mulf %33, %33 : vector<64x128xf32>
    %35 = arith.mulf %21, %34 : vector<64x128xf32>
    %36 = arith.mulf %35, %14 : vector<64x128xf32>
    %c1_i32 = arith.constant 1 : i32
    %37 = arith.muli %arg0, %c1_i32 : i32
    %38 = arith.addi %37, %arg1 : i32
    %c64_i32 = arith.constant 64 : i32
    %39 = arith.muli %38, %c64_i32 : i32
    %40 = tpu.iota {dimensions = array<i32: 0>} : vector<64x128xi32>
    %41 = tpu.iota {dimensions = array<i32: 1>} : vector<64x128xi32>
    %42 = vector.broadcast %39 : i32 to vector<64x128xi32>
    %43 = arith.addi %42, %40 : vector<64x128xi32>
    %c128_i32 = arith.constant 128 : i32
    %44 = vector.broadcast %c128_i32 : i32 to vector<64x128xi32>
    %45 = arith.muli %43, %44 : vector<64x128xi32>
    %46 = arith.addi %45, %41 : vector<64x128xi32>
    %c2048_i32 = arith.constant 2048 : i32
    %47 = vector.broadcast %c2048_i32 : i32 to vector<64x128xi32>
    %48 = arith.cmpi slt, %46, %47 : vector<64x128xi32>
    %cst_13 = arith.constant 0.000000e+00 : f32
    %49 = vector.broadcast %cst_13 : f32 to vector<64x128xf32>
    %50 = arith.select %48, %36, %49 : vector<64x128xi1>, vector<64x128xf32>
    %c0_14 = arith.constant 0 : index
    %c0_15 = arith.constant 0 : index
    %51 = vector.load %arg5[%c0_14, %c0_15] : memref<64x128xf32, #tpu.memory_space<vmem>>, vector<64x128xf32>
    %52 = arith.addf %51, %50 : vector<64x128xf32>
    %c0_16 = arith.constant 0 : index
    %c0_17 = arith.constant 0 : index
    %53 = vector.load %arg5[%c0_16, %c0_17] : memref<64x128xf32, #tpu.memory_space<vmem>>, vector<64x128xf32>
    tpu.vector_store %arg5[%c0_16, %c0_17], %52 {strides = array<i32>} : memref<64x128xf32, #tpu.memory_space<vmem>>, vector<64x128xf32>,
    %c0_i32_18 = arith.constant 0 : i32
    %54 = arith.cmpi eq, %arg1, %c0_i32_18 : i32
    %55 = arith.extui %54 : i1 to i32
    %c0_i32_19 = arith.constant 0 : i32
    %56 = arith.cmpi ne, %55, %c0_i32_19 : i32
    scf.if %56 {
      %c0_20 = arith.constant 0 : index
      %c0_21 = arith.constant 0 : index
      %57 = vector.load %arg5[%c0_20, %c0_21] : memref<64x128xf32, #tpu.memory_space<vmem>>, vector<64x128xf32>
      %58 = vector.extract_strided_slice %57 {offsets = [0, 0], sizes = [8, 128], strides = [1, 1]} : vector<64x128xf32> to vector<8x128xf32>
      %59 = vector.extract_strided_slice %57 {offsets = [8, 0], sizes = [8, 128], strides = [1, 1]} : vector<64x128xf32> to vector<8x128xf32>
      %60 = arith.addf %58, %59 : vector<8x128xf32>
      %61 = vector.extract_strided_slice %57 {offsets = [16, 0], sizes = [8, 128], strides = [1, 1]} : vector<64x128xf32> to vector<8x128xf32>
      %62 = arith.addf %60, %61 : vector<8x128xf32>
      %63 = vector.extract_strided_slice %57 {offsets = [24, 0], sizes = [8, 128], strides = [1, 1]} : vector<64x128xf32> to vector<8x128xf32>
      %64 = arith.addf %62, %63 : vector<8x128xf32>
      %65 = vector.extract_strided_slice %57 {offsets = [32, 0], sizes = [8, 128], strides = [1, 1]} : vector<64x128xf32> to vector<8x128xf32>
      %66 = arith.addf %64, %65 : vector<8x128xf32>
      %67 = vector.extract_strided_slice %57 {offsets = [40, 0], sizes = [8, 128], strides = [1, 1]} : vector<64x128xf32> to vector<8x128xf32>
      %68 = arith.addf %66, %67 : vector<8x128xf32>
      %69 = vector.extract_strided_slice %57 {offsets = [48, 0], sizes = [8, 128], strides = [1, 1]} : vector<64x128xf32> to vector<8x128xf32>
      %70 = arith.addf %68, %69 : vector<8x128xf32>
      %71 = vector.extract_strided_slice %57 {offsets = [56, 0], sizes = [8, 128], strides = [1, 1]} : vector<64x128xf32> to vector<8x128xf32>
      %72 = arith.addf %70, %71 : vector<8x128xf32>
      %c0_22 = arith.constant 0 : index
      %c0_23 = arith.constant 0 : index
      %c0_24 = arith.constant 0 : index
      %73 = vector.load %arg4[%c0_22, %c0_23, %c0_24] : memref<1x8x128xf32, #tpu.memory_space<vmem>>, vector<1x8x128xf32>
      %74 = vector.shape_cast %73 : vector<1x8x128xf32> to vector<8x128xf32>
      %75 = vector.shape_cast %72 : vector<8x128xf32> to vector<1x8x128xf32>
      tpu.vector_store %arg4[%c0_22, %c0_23, %c0_24], %75 {strides = array<i32>} : memref<1x8x128xf32, #tpu.memory_space<vmem>>, vector<1x8x128xf32>,
    } else {
    }
    return
  }
  func.func @transform_0(%arg0: i32, %arg1: i32) -> (i32, i32) {
    %c1_i32 = arith.constant 1 : i32
    %0 = arith.muli %arg0, %c1_i32 : i32
    %1 = arith.addi %0, %arg1 : i32
    %c0_i32 = arith.constant 0 : i32
    %c0_i32_0 = arith.constant 0 : i32
    return %1, %c0_i32 : i32, i32
  }
  func.func @transform_1(%arg0: i32, %arg1: i32) -> (i32, i32) {
    %c1_i32 = arith.constant 1 : i32
    %0 = arith.muli %arg0, %c1_i32 : i32
    %1 = arith.addi %0, %arg1 : i32
    %c0_i32 = arith.constant 0 : i32
    %c0_i32_0 = arith.constant 0 : i32
    return %1, %c0_i32 : i32, i32
  }
  func.func @transform_2(%arg0: i32, %arg1: i32) -> (i32, i32, i32) {
    %c0_i32 = arith.constant 0 : i32
    %c0_i32_0 = arith.constant 0 : i32
    %c0_i32_1 = arith.constant 0 : i32
    return %arg0, %c0_i32, %c0_i32_0 : i32, i32, i32
  }
}

</mosaic_0001>

<llo_original>
// kernel: tpu_custom_call.1
$region0: #{tpu_custom_call.1}
  #allocation0 [shape = 'u32[]', space=smem, size = 0x4, offset = 0x4, fixed_abs, tag = 'smem constant byte address 0x4 - core index']
  #allocation1 [shape = 'u32[144,128]{1,0:T(1,128)}', space=vmem, size = 0x12000, scoped, tag = 'internal scratch']
  #allocation2 [shape = 'f32[64,128]{1,0:T(8,128)}', space=vmem, size = 0x8000, scoped, tag = 'scratch operand']
  %s0 = inlined_call_operand.hbm [shape: f32[64,128], index: 0, kind: input, shape index: {}]
  %s1 = inlined_call_operand.hbm [shape: f32[64,128], index: 1, kind: input, shape index: {}]
  %s2 = inlined_call_operand.hbm [shape: f32[1,8,128], index: 2, kind: output, shape index: {}]
  %s3 = sld [smem:[#allocation0]]
  $region34: #{tpu_custom_call.1} parent=0
    _
  %s5 = ssub.s32 1, %s3
  %s6 = scalar_select 0, %s5, %s3
  $region1: #{tpu_custom_call.1} parent=0
    #allocation3 [shape = 'u8[32768]{0}', space=vmem, size = 0x8000, scoped, tag = 'input window, operand 0, single buffered']
    #allocation4 [shape = 's32[1]{0}', space=sflag, size = 0x4, scoped, tag = 'scoped memory for tpu_custom_call.1']
    #allocation5 [shape = 's32[1]{0}', space=sflag, size = 0x4, scoped, tag = 'scoped memory for tpu_custom_call.1']
    #allocation6 [shape = 'u8[32768]{0}', space=vmem, size = 0x8000, scoped, tag = 'input window, operand 1, single buffered']
    #allocation7 [shape = 's32[1]{0}', space=sflag, size = 0x4, scoped, tag = 'scoped memory for tpu_custom_call.1']
    #allocation8 [shape = 'u8[4096]{0}', space=vmem, size = 0x1000, scoped, tag = 'output window, operand 0, single buffered']
    %7 = vsyncpa [#allocation4], 0
    %8 = vsyncpa [#allocation7], 0
    %9 = vsyncpa [#allocation5], 0
    // Predicated region
    $region2: #{tpu_custom_call.1} parent=1 // pred_check
      _
    $region3: #{tpu_custom_call.1} parent=1 // pred_check_branch
      %11 = sbr.rel (0) target = $region5
    $region4: #{tpu_custom_call.1} parent=1 // pred_region
      %s12 = sadd.s32 0, 0
      %s13 = smul.u32 8, %s12
      %s15 = ssub.s32 1024, 1024
      %16 = vsyncadd [#allocation4], %s15
      %s17 = smul.addr %s13, 128
      %s18 = scalar_lea.hbm %s0, %s17
      %s19 = sshll.u32 [#allocation3], 4
      %s20 = int_to_ptr.vmem [resolvable:$true] %s19
      %25 = dma.hbm_to_vmem [thread:$0]  %s18, 1024, %s20, [#allocation4], 128, 128, 8
    $region5: #{tpu_custom_call.1} parent=1 // pred_fallthru
      _
    // Predicated region
    $region6: #{tpu_custom_call.1} parent=1 // pred_check
      _
    $region7: #{tpu_custom_call.1} parent=1 // pred_check_branch
      %27 = sbr.rel (0) target = $region9
    $region8: #{tpu_custom_call.1} parent=1 // pred_region
      %s28 = sadd.s32 0, 0
      %s29 = smul.u32 8, %s28
      %s31 = ssub.s32 1024, 1024
      %32 = vsyncadd [#allocation7], %s31
      %s33 = smul.addr %s29, 128
      %s34 = scalar_lea.hbm %s1, %s33
      %s35 = sshll.u32 [#allocation6], 4
      %s36 = int_to_ptr.vmem [resolvable:$true] %s35
      %41 = dma.hbm_to_vmem [thread:$0]  %s34, 1024, %s36, [#allocation7], 128, 128, 8
    $region9: #{tpu_custom_call.1} parent=1 // pred_fallthru
      _
    // Predicated region
    $region10: #{tpu_custom_call.1} parent=1 // pred_check
      _
    $region11: #{tpu_custom_call.1} parent=1 // pred_check_branch
      %43 = sbr.rel (0) target = $region13
    $region12: #{tpu_custom_call.1} parent=1 // pred_region
      %44 = dma.done [#allocation4], 1024
    $region13: #{tpu_custom_call.1} parent=1 // pred_fallthru
      _
    // Predicated region
    $region14: #{tpu_custom_call.1} parent=1 // pred_check
      _
    $region15: #{tpu_custom_call.1} parent=1 // pred_check_branch
      %46 = sbr.rel (0) target = $region17
    $region16: #{tpu_custom_call.1} parent=1 // pred_region
      %47 = dma.done [#allocation7], 1024
    $region17: #{tpu_custom_call.1} parent=1 // pred_fallthru
      _
    %s48 = sadd.s32 0, 0
    %s49 = smul.u32 8, %s48
    %s50 = sadd.s32 0, 0
    %s51 = smul.u32 8, %s50
    %p52 = scmp.eq.s32.totalorder 0, 0
    // Predicated region
    $region18: #{tpu_custom_call.1} parent=1 // pred_check
      %p53 = pneg %p52
    $region19: #{tpu_custom_call.1} parent=1 // pred_check_branch
      %55 = sbr.rel (%p53) target = $region21
    $region20: #{tpu_custom_call.1} parent=1 // pred_region
      %56 = vst [vmem:[#allocation2] sm:$0xff] 0.0
      %57 = vst [vmem:[#allocation2 + $0x8] sm:$0xff] 0.0
      %58 = vst [vmem:[#allocation2 + $0x10] sm:$0xff] 0.0
      %59 = vst [vmem:[#allocation2 + $0x18] sm:$0xff] 0.0
      %60 = vst [vmem:[#allocation2 + $0x20] sm:$0xff] 0.0
      %61 = vst [vmem:[#allocation2 + $0x28] sm:$0xff] 0.0
      %62 = vst [vmem:[#allocation2 + $0x30] sm:$0xff] 0.0
      %63 = vst [vmem:[#allocation2 + $0x38] sm:$0xff] 0.0
    $region21: #{tpu_custom_call.1} parent=1 // pred_fallthru
      _
    %v64 = vld [vmem:[#allocation3] sm:$0xff]
    %v65 = vld [vmem:[#allocation3 + $0x8] sm:$0xff]
    %v66 = vld [vmem:[#allocation3 + $0x10] sm:$0xff]
    %v67 = vld [vmem:[#allocation3 + $0x18] sm:$0xff]
    %v68 = vld [vmem:[#allocation3 + $0x20] sm:$0xff]
    %v69 = vld [vmem:[#allocation3 + $0x28] sm:$0xff]
    %v70 = vld [vmem:[#allocation3 + $0x30] sm:$0xff]
    %v71 = vld [vmem:[#allocation3 + $0x38] sm:$0xff]
    %v72 = vld [vmem:[#allocation6] sm:$0xff]
    %v73 = vld [vmem:[#allocation6 + $0x8] sm:$0xff]
    %v74 = vld [vmem:[#allocation6 + $0x10] sm:$0xff]
    %v75 = vld [vmem:[#allocation6 + $0x18] sm:$0xff]
    %v76 = vld [vmem:[#allocation6 + $0x20] sm:$0xff]
    %v77 = vld [vmem:[#allocation6 + $0x28] sm:$0xff]
    %v78 = vld [vmem:[#allocation6 + $0x30] sm:$0xff]
    %v79 = vld [vmem:[#allocation6 + $0x38] sm:$0xff]
    %v80 = vand.u32 2147483647, %v64
    %v81 = vand.u32 2147483647, %v65
    %v82 = vand.u32 2147483647, %v66
    %v83 = vand.u32 2147483647, %v67
    %v84 = vand.u32 2147483647, %v68
    %v85 = vand.u32 2147483647, %v69
    %v86 = vand.u32 2147483647, %v70
    %v87 = vand.u32 2147483647, %v71
    %v88 = vsub.f32 0.0, %v80
    %v89 = vsub.f32 0.0, %v81
    %v90 = vsub.f32 0.0, %v82
    %v91 = vsub.f32 0.0, %v83
    %v92 = vsub.f32 0.0, %v84
    %v93 = vsub.f32 0.0, %v85
    %v94 = vsub.f32 0.0, %v86
    %v95 = vsub.f32 0.0, %v87
    %v96 = vmul.f32 %v88, 1.442695
    %v97 = vpow.pop %v96
    %v98 = vmul.f32 %v89, 1.442695
    %v99 = vpow.pop %v98
    %v100 = vmul.f32 %v90, 1.442695
    %v101 = vpow.pop %v100
    %v102 = vmul.f32 %v91, 1.442695
    %v103 = vpow.pop %v102
    %v104 = vmul.f32 %v92, 1.442695
    %v105 = vpow.pop %v104
    %v106 = vmul.f32 %v93, 1.442695
    %v107 = vpow.pop %v106
    %v108 = vmul.f32 %v94, 1.442695
    %v109 = vpow.pop %v108
    %v110 = vmul.f32 %v95, 1.442695
    %v111 = vpow.pop %v110
    %v112 = vmax.f32 %v64, 0.0
    %v113 = vmax.f32 %v65, 0.0
    %v114 = vmax.f32 %v66, 0.0
    %v115 = vmax.f32 %v67, 0.0
    %v116 = vmax.f32 %v68, 0.0
    %v117 = vmax.f32 %v69, 0.0
    %v118 = vmax.f32 %v70, 0.0
    %v119 = vmax.f32 %v71, 0.0
    %v120 = vmul.f32 %v64, %v72
    %v121 = vmul.f32 %v65, %v73
    %v122 = vmul.f32 %v66, %v74
    %v123 = vmul.f32 %v67, %v75
    %v124 = vmul.f32 %v68, %v76
    %v125 = vmul.f32 %v69, %v77
    %v126 = vmul.f32 %v70, %v78
    %v127 = vmul.f32 %v71, %v79
    %v128 = vsub.f32 %v112, %v120
    %v129 = vsub.f32 %v113, %v121
    %v130 = vsub.f32 %v114, %v122
    %v131 = vsub.f32 %v115, %v123
    %v132 = vsub.f32 %v116, %v124
    %v133 = vsub.f32 %v117, %v125
    %v134 = vsub.f32 %v118, %v126
    %v135 = vsub.f32 %v119, %v127
    %v136 = vadd.f32 %v97, 1.0
    %v137 = vlog2.pop %v136
    %v138 = vmul.f32 %v137, 0.6931472
    %v139 = vmul.f32 -0.5, %v97
    %v140 = vadd.f32 %v139, 1.0
    %v141 = vmul.f32 %v140, %v97
    %v142 = vand.u32 2147483647, %v97
    %vm143 = vcmp.lt.f32.partialorder %v142, 0.0004427343
    %v144 = vsel %vm143, %v141, %v138
    %v145 = vadd.f32 %v99, 1.0
    %v146 = vlog2.pop %v145
    %v147 = vmul.f32 %v146, 0.6931472
    %v148 = vmul.f32 -0.5, %v99
    %v149 = vadd.f32 %v148, 1.0
    %v150 = vmul.f32 %v149, %v99
    %v151 = vand.u32 2147483647, %v99
    %vm152 = vcmp.lt.f32.partialorder %v151, 0.0004427343
    %v153 = vsel %vm152, %v150, %v147
    %v154 = vadd.f32 %v101, 1.0
    %v155 = vlog2.pop %v154
    %v156 = vmul.f32 %v155, 0.6931472
    %v157 = vmul.f32 -0.5, %v101
    %v158 = vadd.f32 %v157, 1.0
    %v159 = vmul.f32 %v158, %v101
    %v160 = vand.u32 2147483647, %v101
    %vm161 = vcmp.lt.f32.partialorder %v160, 0.0004427343
    %v162 = vsel %vm161, %v159, %v156
    %v163 = vadd.f32 %v103, 1.0
    %v164 = vlog2.pop %v163
    %v165 = vmul.f32 %v164, 0.6931472
    %v166 = vmul.f32 -0.5, %v103
    %v167 = vadd.f32 %v166, 1.0
    %v168 = vmul.f32 %v167, %v103
    %v169 = vand.u32 2147483647, %v103
    %vm170 = vcmp.lt.f32.partialorder %v169, 0.0004427343
    %v171 = vsel %vm170, %v168, %v165
    %v172 = vadd.f32 %v105, 1.0
    %v173 = vlog2.pop %v172
    %v174 = vmul.f32 %v173, 0.6931472
    %v175 = vmul.f32 -0.5, %v105
    %v176 = vadd.f32 %v175, 1.0
    %v177 = vmul.f32 %v176, %v105
    %v178 = vand.u32 2147483647, %v105
    %vm179 = vcmp.lt.f32.partialorder %v178, 0.0004427343
    %v180 = vsel %vm179, %v177, %v174
    %v181 = vadd.f32 %v107, 1.0
    %v182 = vlog2.pop %v181
    %v183 = vmul.f32 %v182, 0.6931472
    %v184 = vmul.f32 -0.5, %v107
    %v185 = vadd.f32 %v184, 1.0
    %v186 = vmul.f32 %v185, %v107
    %v187 = vand.u32 2147483647, %v107
    %vm188 = vcmp.lt.f32.partialorder %v187, 0.0004427343
    %v189 = vsel %vm188, %v186, %v183
    %v190 = vadd.f32 %v109, 1.0
    %v191 = vlog2.pop %v190
    %v192 = vmul.f32 %v191, 0.6931472
    %v193 = vmul.f32 -0.5, %v109
    %v194 = vadd.f32 %v193, 1.0
    %v195 = vmul.f32 %v194, %v109
    %v196 = vand.u32 2147483647, %v109
    %vm197 = vcmp.lt.f32.partialorder %v196, 0.0004427343
    %v198 = vsel %vm197, %v195, %v192
    %v199 = vadd.f32 %v111, 1.0
    %v200 = vlog2.pop %v199
    %v201 = vmul.f32 %v200, 0.6931472
    %v202 = vmul.f32 -0.5, %v111
    %v203 = vadd.f32 %v202, 1.0
    %v204 = vmul.f32 %v203, %v111
    %v205 = vand.u32 2147483647, %v111
    %vm206 = vcmp.lt.f32.partialorder %v205, 0.0004427343
    %v207 = vsel %vm206, %v204, %v201
    %v208 = vadd.f32 %v128, %v144
    %v209 = vadd.f32 %v129, %v153
    %v210 = vadd.f32 %v130, %v162
    %v211 = vadd.f32 %v131, %v171
    %v212 = vadd.f32 %v132, %v180
    %v213 = vadd.f32 %v133, %v189
    %v214 = vadd.f32 %v134, %v198
    %v215 = vadd.f32 %v135, %v207
    %v216 = vmul.f32 %v72, 0.25
    %v217 = vmul.f32 %v73, 0.25
    %v218 = vmul.f32 %v74, 0.25
    %v219 = vmul.f32 %v75, 0.25
    %v220 = vmul.f32 %v76, 0.25
    %v221 = vmul.f32 %v77, 0.25
    %v222 = vmul.f32 %v78, 0.25
    %v223 = vmul.f32 %v79, 0.25
    %v224 = vsub.f32 1.0, %v72
    %v225 = vsub.f32 1.0, %v73
    %v226 = vsub.f32 1.0, %v74
    %v227 = vsub.f32 1.0, %v75
    %v228 = vsub.f32 1.0, %v76
    %v229 = vsub.f32 1.0, %v77
    %v230 = vsub.f32 1.0, %v78
    %v231 = vsub.f32 1.0, %v79
    %v232 = vmul.f32 %v224, 0.75
    %v233 = vmul.f32 %v225, 0.75
    %v234 = vmul.f32 %v226, 0.75
    %v235 = vmul.f32 %v227, 0.75
    %v236 = vmul.f32 %v228, 0.75
    %v237 = vmul.f32 %v229, 0.75
    %v238 = vmul.f32 %v230, 0.75
    %v239 = vmul.f32 %v231, 0.75
    %v240 = vadd.f32 %v216, %v232
    %v241 = vadd.f32 %v217, %v233
    %v242 = vadd.f32 %v218, %v234
    %v243 = vadd.f32 %v219, %v235
    %v244 = vadd.f32 %v220, %v236
    %v245 = vadd.f32 %v221, %v237
    %v246 = vadd.f32 %v222, %v238
    %v247 = vadd.f32 %v223, %v239
    %vm248 = vcmp.ge.f32.partialorder %v64, 0.0
    %vm249 = vcmp.ge.f32.partialorder %v65, 0.0
    %vm250 = vcmp.ge.f32.partialorder %v66, 0.0
    %vm251 = vcmp.ge.f32.partialorder %v67, 0.0
    %vm252 = vcmp.ge.f32.partialorder %v68, 0.0
    %vm253 = vcmp.ge.f32.partialorder %v69, 0.0
    %vm254 = vcmp.ge.f32.partialorder %v70, 0.0
    %vm255 = vcmp.ge.f32.partialorder %v71, 0.0
    %vm256 = vcmp.gt.f32.partialorder %v72, 0.5
    %vm257 = vcmp.gt.f32.partialorder %v73, 0.5
    %vm258 = vcmp.gt.f32.partialorder %v74, 0.5
    %vm259 = vcmp.gt.f32.partialorder %v75, 0.5
    %vm260 = vcmp.gt.f32.partialorder %v76, 0.5
    %vm261 = vcmp.gt.f32.partialorder %v77, 0.5
    %vm262 = vcmp.gt.f32.partialorder %v78, 0.5
    %vm263 = vcmp.gt.f32.partialorder %v79, 0.5
    %vm264 = vmxor %vm248, %vm256
    %vm265 = vmxor %vm249, %vm257
    %vm266 = vmxor %vm250, %vm258
    %vm267 = vmxor %vm251, %vm259
    %vm268 = vmxor %vm252, %vm260
    %vm269 = vmxor %vm253, %vm261
    %vm270 = vmxor %vm254, %vm262
    %vm271 = vmxor %vm255, %vm263
    %v272 = vsel %vm264, %v97, 1.0
    %v273 = vsel %vm265, %v99, 1.0
    %v274 = vsel %vm266, %v101, 1.0
    %v275 = vsel %vm267, %v103, 1.0
    %v276 = vsel %vm268, %v105, 1.0
    %v277 = vsel %vm269, %v107, 1.0
    %v278 = vsel %vm270, %v109, 1.0
    %v279 = vsel %vm271, %v111, 1.0
    %v280 = vadd.f32 %v97, 1.0
    %v281 = vadd.f32 %v99, 1.0
    %v282 = vadd.f32 %v101, 1.0
    %v283 = vadd.f32 %v103, 1.0
    %v284 = vadd.f32 %v105, 1.0
    %v285 = vadd.f32 %v107, 1.0
    %v286 = vadd.f32 %v109, 1.0
    %v287 = vadd.f32 %v111, 1.0
    %v288 = vrcp.pop %v280
    %v289 = vmul.f32 %v272, %v288
    %v290 = vrcp.pop %v281
    %v291 = vmul.f32 %v273, %v290
    %v292 = vrcp.pop %v282
    %v293 = vmul.f32 %v274, %v292
    %v294 = vrcp.pop %v283
    %v295 = vmul.f32 %v275, %v294
    %v296 = vrcp.pop %v284
    %v297 = vmul.f32 %v276, %v296
    %v298 = vrcp.pop %v285
    %v299 = vmul.f32 %v277, %v298
    %v300 = vrcp.pop %v286
    %v301 = vmul.f32 %v278, %v300
    %v302 = vrcp.pop %v287
    %v303 = vmul.f32 %v279, %v302
    %v304 = vsub.f32 1.0, %v289
    %v305 = vsub.f32 1.0, %v291
    %v306 = vsub.f32 1.0, %v293
    %v307 = vsub.f32 1.0, %v295
    %v308 = vsub.f32 1.0, %v297
    %v309 = vsub.f32 1.0, %v299
    %v310 = vsub.f32 1.0, %v301
    %v311 = vsub.f32 1.0, %v303
    %v312 = vmul.f32 %v304, %v304
    %v313 = vmul.f32 %v305, %v305
    %v314 = vmul.f32 %v306, %v306
    %v315 = vmul.f32 %v307, %v307
    %v316 = vmul.f32 %v308, %v308
    %v317 = vmul.f32 %v309, %v309
    %v318 = vmul.f32 %v310, %v310
    %v319 = vmul.f32 %v311, %v311
    %v320 = vmul.f32 %v240, %v312
    %v321 = vmul.f32 %v241, %v313
    %v322 = vmul.f32 %v242, %v314
    %v323 = vmul.f32 %v243, %v315
    %v324 = vmul.f32 %v244, %v316
    %v325 = vmul.f32 %v245, %v317
    %v326 = vmul.f32 %v246, %v318
    %v327 = vmul.f32 %v247, %v319
    %v328 = vmul.f32 %v320, %v208
    %v329 = vmul.f32 %v321, %v209
    %v330 = vmul.f32 %v322, %v210
    %v331 = vmul.f32 %v323, %v211
    %v332 = vmul.f32 %v324, %v212
    %v333 = vmul.f32 %v325, %v213
    %v334 = vmul.f32 %v326, %v214
    %v335 = vmul.f32 %v327, %v215
    %s336 = sadd.s32 0, 0
    %s337 = smul.u32 %s336, 64
    %v338 = vlaneseq
    %v339 = vshrl.u32 %v338, 7
    %v340 = vadd.s32 %v339, 8
    %v341 = vadd.s32 %v339, 16
    %v342 = vadd.s32 %v339, 24
    %v343 = vadd.s32 %v339, 32
    %v344 = vadd.s32 %v339, 40
    %v345 = vadd.s32 %v339, 48
    %v346 = vadd.s32 %v339, 56
    %v347 = vlaneseq
    %v348 = vand.u32 %v347, 127
    %v349 = vstv %s337
    %v350 = vadd.s32 %v349, %v339
    %v351 = vadd.s32 %v349, %v340
    %v352 = vadd.s32 %v349, %v341
    %v353 = vadd.s32 %v349, %v342
    %v354 = vadd.s32 %v349, %v343
    %v355 = vadd.s32 %v349, %v344
    %v356 = vadd.s32 %v349, %v345
    %v357 = vadd.s32 %v349, %v346
    %v358 = vmul.u32 %v350, 128
    %v359 = vmul.u32 %v351, 128
    %v360 = vmul.u32 %v352, 128
    %v361 = vmul.u32 %v353, 128
    %v362 = vmul.u32 %v354, 128
    %v363 = vmul.u32 %v355, 128
    %v364 = vmul.u32 %v356, 128
    %v365 = vmul.u32 %v357, 128
    %v366 = vadd.s32 %v358, %v348
    %v367 = vadd.s32 %v359, %v348
    %v368 = vadd.s32 %v360, %v348
    %v369 = vadd.s32 %v361, %v348
    %v370 = vadd.s32 %v362, %v348
    %v371 = vadd.s32 %v363, %v348
    %v372 = vadd.s32 %v364, %v348
    %v373 = vadd.s32 %v365, %v348
    %vm374 = vcmp.lt.s32.totalorder %v366, 2048
    %vm375 = vcmp.lt.s32.totalorder %v367, 2048
    %vm376 = vcmp.lt.s32.totalorder %v368, 2048
    %vm377 = vcmp.lt.s32.totalorder %v369, 2048
    %vm378 = vcmp.lt.s32.totalorder %v370, 2048
    %vm379 = vcmp.lt.s32.totalorder %v371, 2048
    %vm380 = vcmp.lt.s32.totalorder %v372, 2048
    %vm381 = vcmp.lt.s32.totalorder %v373, 2048
    %v382 = vsel %vm374, %v328, 0.0
    %v383 = vsel %vm375, %v329, 0.0
    %v384 = vsel %vm376, %v330, 0.0
    %v385 = vsel %vm377, %v331, 0.0
    %v386 = vsel %vm378, %v332, 0.0
    %v387 = vsel %vm379, %v333, 0.0
    %v388 = vsel %vm380, %v334, 0.0
    %v389 = vsel %vm381, %v335, 0.0
    %v390 = vld [vmem:[#allocation2] sm:$0xff]
    %v391 = vld [vmem:[#allocation2 + $0x8] sm:$0xff]
    %v392 = vld [vmem:[#allocation2 + $0x10] sm:$0xff]
    %v393 = vld [vmem:[#allocation2 + $0x18] sm:$0xff]
    %v394 = vld [vmem:[#allocation2 + $0x20] sm:$0xff]
    %v395 = vld [vmem:[#allocation2 + $0x28] sm:$0xff]
    %v396 = vld [vmem:[#allocation2 + $0x30] sm:$0xff]
    %v397 = vld [vmem:[#allocation2 + $0x38] sm:$0xff]
    %v398 = vadd.f32 %v390, %v382
    %v399 = vadd.f32 %v391, %v383
    %v400 = vadd.f32 %v392, %v384
    %v401 = vadd.f32 %v393, %v385
    %v402 = vadd.f32 %v394, %v386
    %v403 = vadd.f32 %v395, %v387
    %v404 = vadd.f32 %v396, %v388
    %v405 = vadd.f32 %v397, %v389
    %406 = vst [vmem:[#allocation2] sm:$0xff] %v398
    %407 = vst [vmem:[#allocation2 + $0x8] sm:$0xff] %v399
    %408 = vst [vmem:[#allocation2 + $0x10] sm:$0xff] %v400
    %409 = vst [vmem:[#allocation2 + $0x18] sm:$0xff] %v401
    %410 = vst [vmem:[#allocation2 + $0x20] sm:$0xff] %v402
    %411 = vst [vmem:[#allocation2 + $0x28] sm:$0xff] %v403
    %412 = vst [vmem:[#allocation2 + $0x30] sm:$0xff] %v404
    %413 = vst [vmem:[#allocation2 + $0x38] sm:$0xff] %v405
    // Predicated region
    $region22: #{tpu_custom_call.1} parent=1 // pred_check
      %p414 = pneg %p52
    $region23: #{tpu_custom_call.1} parent=1 // pred_check_branch
      %416 = sbr.rel (%p414) target = $region25
    $region24: #{tpu_custom_call.1} parent=1 // pred_region
      %v417 = vld [vmem:[#allocation2] sm:$0xff]
      %v418 = vld [vmem:[#allocation2 + $0x8] sm:$0xff]
      %v419 = vld [vmem:[#allocation2 + $0x10] sm:$0xff]
      %v420 = vld [vmem:[#allocation2 + $0x18] sm:$0xff]
      %v421 = vld [vmem:[#allocation2 + $0x20] sm:$0xff]
      %v422 = vld [vmem:[#allocation2 + $0x28] sm:$0xff]
      %v423 = vld [vmem:[#allocation2 + $0x30] sm:$0xff]
      %v424 = vld [vmem:[#allocation2 + $0x38] sm:$0xff]
      %v425 = vadd.f32 %v417, %v418
      %v426 = vadd.f32 %v425, %v419
      %v427 = vadd.f32 %v426, %v420
      %v428 = vadd.f32 %v427, %v421
      %v429 = vadd.f32 %v428, %v422
      %v430 = vadd.f32 %v429, %v423
      %v431 = vadd.f32 %v430, %v424
      %432 = vst [vmem:[#allocation8] sm:$0xff] %v431
    $region25: #{tpu_custom_call.1} parent=1 // pred_fallthru
      _
    // Predicated region
    $region26: #{tpu_custom_call.1} parent=1 // pred_check
      _
    $region27: #{tpu_custom_call.1} parent=1 // pred_check_branch
      %434 = sbr.rel (0) target = $region29
    $region28: #{tpu_custom_call.1} parent=1 // pred_region
      %s436 = ssub.s32 128, 128
      %437 = vsyncadd [#allocation5], %s436
      %s439 = sshll.u32 [#allocation8], 4
      %s440 = int_to_ptr.vmem [resolvable:$true] %s439
      %442 = dma.vmem_to_hbm [thread:$0]  %s440, 128, %s2, [#allocation5]
    $region29: #{tpu_custom_call.1} parent=1 // pred_fallthru
      _
    // Predicated region
    $region30: #{tpu_custom_call.1} parent=1 // pred_check
      _
    $region31: #{tpu_custom_call.1} parent=1 // pred_check_branch
      %444 = sbr.rel (0) target = $region33
    $region32: #{tpu_custom_call.1} parent=1 // pred_region
      %445 = dma.done [#allocation5], 128
    $region33: #{tpu_custom_call.1} parent=1 // pred_fallthru
      _
    %446 = vsyncpa [#allocation4], 1
    %447 = vsyncpa [#allocation7], 1
    %448 = vsyncpa [#allocation5], 1

</llo_original>
